<compile_context>
chip_gen: v7x
topology: tpu7x:2x2x1
jax: 0.10.0
libtpu: 0.0.40
codegen_flags: <defaults>
</compile_context>

<pallas_src>
import functools

import jax
import jax.numpy as jnp
from jax import lax
from jax.experimental import pallas as pl
from jax.experimental.pallas import tpu as pltpu

_BIG = 1e30  # sentinel; far larger than any realistic squared embedding distance


def _triplet_tile_kernel(xr_ref, xc_ref, rlab_ref, clab_ref, sqr_ref, sqc_ref,
                         out_ref, max_acc, min_acc, *, margin, block_n):
    j = pl.program_id(1)

    @pl.when(j == 0)
    def _init():
        max_acc[...] = jnp.full_like(max_acc, -_BIG)
        min_acc[...] = jnp.full_like(min_acc, _BIG)

    # (TM, TN) Gram tile on the MXU; transpose folded into the contraction.
    gram = lax.dot_general(
        xr_ref[...], xc_ref[...],
        dimension_numbers=(((1,), (1,)), ((), ())),
        preferred_element_type=jnp.float32,
    )                                                   # (TM, TN) f32

    rlab = rlab_ref[...]            # (TM, 1) int32
    pos_best = max_acc[...]         # (TM, 128) running max of (sq_c - 2*gram), positives
    neg_best = min_acc[...]         # (TM, 128) running min, negatives
    # Fold the TN columns 128 lanes at a time with elementwise (VPU) max/min;
    # the cross-lane (XLU) reduction happens only once, in finalize.
    for c in range(block_n // 128):
        lo = c * 128
        part = sqc_ref[:, lo:lo + 128] - 2.0 * gram[:, lo:lo + 128]   # (TM, 128)
        same = rlab == clab_ref[:, lo:lo + 128]                        # (TM, 128)
        pos_best = jnp.maximum(pos_best, jnp.where(same, part, -_BIG))
        neg_best = jnp.minimum(neg_best, jnp.where(same, _BIG, part))
    max_acc[...] = pos_best
    min_acc[...] = neg_best

    @pl.when(j == pl.num_programs(1) - 1)
    def _finalize():
        sq_r = sqr_ref[...]                                            # (TM, 1)
        ap2 = sq_r + jnp.max(max_acc[...], axis=1, keepdims=True)
        an2 = sq_r + jnp.min(min_acc[...], axis=1, keepdims=True)
        dist_ap = jnp.sqrt(jnp.maximum(ap2, 1e-12))
        dist_an = jnp.sqrt(jnp.maximum(an2, 1e-12))
        out_ref[...] = jnp.maximum(dist_ap - dist_an + jnp.float32(margin), 0.0)


def _vmem_limit_bytes():
    try:
        cap = pltpu.get_tpu_info().vmem_capacity_bytes
    except Exception:
        cap = 64 * 1024 * 1024           # conservative default (v7x per-TC VMEM)
    # ~48 MiB on v7x (64 MiB physical), ~96 MiB on v5e/v6e (128 MiB physical).
    return max(32 * 1024 * 1024, min(int(cap * 3 // 4), 100 * 1024 * 1024))


def _choose_tiles(n_pad, d_pad, itemsize, budget):
    def fits(tm, tn):
        x_bufs = 2 * (tm + tn) * d_pad * itemsize       # double-buffered x tiles
        gram = tm * tn * 4                              # f32 MXU tile result
        scratch = 2 * tm * 128 * 4                      # widened accumulators
        small = 4 * (tm + tn) * 4 + 2 * tm * 4          # labels / norms / output
        return x_bufs + gram + scratch + small <= budget

    # Row tile: 128-aligned; keep grid_r >= 2 where possible (v7x has 2 TCs).
    tms = [256, 128] if (n_pad >= 512 and n_pad % 256 == 0) else [128]
    # Prefer a fully resident column operand (grid_c == 1): columns are then read
    # from HBM exactly once instead of grid_r times.
    for tm in tms:
        if fits(tm, n_pad):
            return tm, n_pad
    for tm in tms:
        for tn in (1024, 512, 256, 128):
            if tn <= n_pad and n_pad % tn == 0 and fits(tm, tn):
                return tm, tn
    return 128, 128


def triplet_loss_pallas(inputs, targets, margin=0.3):
    """inputs: (n, d) float array; targets: (n,) int class labels (>= INT32_MIN+1).

    Returns the scalar f32 batch-hard triplet loss (MarginRankingLoss, mean).
    """
    n, d = inputs.shape
    n_pad = pl.cdiv(n, 128) * 128
    d_pad = pl.cdiv(d, 128) * 128    # zero-padding D changes neither Gram nor norms

    x_p = jnp.pad(inputs, ((0, n_pad - n), (0, d_pad - d)))

    # Squared norms hoisted out of the kernel (computed once, in f32).
    x32 = x_p.astype(jnp.float32)
    sq_row = jnp.sum(x32 * x32, axis=1, keepdims=True)               # (n_pad, 1)
    col_idx = jnp.arange(n_pad)
    # Padded columns get a huge squared norm so they never win the negative min.
    sq_col = jnp.where(col_idx < n, sq_row[:, 0], _BIG).reshape(1, n_pad)

    # Pad labels with a value strictly below every real label so padded columns
    # can never be mistaken for positives of any valid row.
    t32 = targets.astype(jnp.int32)
    pad_label = jnp.min(t32) - 1
    labels = jnp.full((n_pad,), pad_label, jnp.int32).at[:n].set(t32)
    rlab = labels.reshape(n_pad, 1)
    clab = labels.reshape(1, n_pad)

    itemsize = jnp.dtype(inputs.dtype).itemsize
    vmem_limit = _vmem_limit_bytes()
    tm, tn = _choose_tiles(n_pad, d_pad, itemsize, int(vmem_limit * 0.85))
    grid_r, grid_c = n_pad // tm, n_pad // tn

    kernel = functools.partial(_triplet_tile_kernel,
                               margin=float(margin), block_n=tn)

    col_reads = grid_r if grid_c > 1 else 1
    cost = pl.CostEstimate(
        flops=2 * n_pad * n_pad * d_pad,
        transcendentals=2 * n_pad,
        bytes_accessed=n_pad * d_pad * itemsize * (1 + col_reads)
        + (1 + col_reads) * n_pad * 8 + n_pad * 4,
    )

    hinge = pl.pallas_call(
        kernel,
        out_shape=jax.ShapeDtypeStruct((n_pad, 1), jnp.float32),
        grid=(grid_r, grid_c),
        in_specs=[
            pl.BlockSpec((tm, d_pad), lambda i, j: (i, 0)),   # x row tile
            pl.BlockSpec((tn, d_pad), lambda i, j: (j, 0)),   # x column tile
            pl.BlockSpec((tm, 1), lambda i, j: (i, 0)),       # row labels
            pl.BlockSpec((1, tn), lambda i, j: (0, j)),       # column labels
            pl.BlockSpec((tm, 1), lambda i, j: (i, 0)),       # row squared norms
            pl.BlockSpec((1, tn), lambda i, j: (0, j)),       # column squared norms
        ],
        out_specs=pl.BlockSpec((tm, 1), lambda i, j: (i, 0)),
        scratch_shapes=[
            pltpu.VMEM((tm, 128), jnp.float32),   # running max over positives
            pltpu.VMEM((tm, 128), jnp.float32),   # running min over negatives
        ],
        compiler_params=pltpu.CompilerParams(
            dimension_semantics=("parallel", "arbitrary"),
            vmem_limit_bytes=vmem_limit,
        ),
        cost_estimate=cost,
    )(x_p, x_p, rlab, clab, sq_row, sq_col)

    # MarginRankingLoss(margin, reduction='mean') with y = +1.
    return jnp.mean(hinge[:n, 0])


def triplet_loss_ref(inputs, targets, margin=0.3):
    """Pure-JAX reference mirroring the PyTorch forward."""
    x = inputs.astype(jnp.float32)
    sq = jnp.sum(x * x, axis=1, keepdims=True)
    dist = jnp.sqrt(jnp.maximum(sq + sq.T - 2.0 * (x @ x.T), 1e-12))
    mask = targets[:, None] == targets[None, :]
    dist_ap = jnp.max(jnp.where(mask, dist, -jnp.inf), axis=1)
    dist_an = jnp.min(jnp.where(mask, jnp.inf, dist), axis=1)
    return jnp.mean(jnp.maximum(dist_ap - dist_an + margin, 0.0))


if __name__ == "__main__":
    key = jax.random.PRNGKey(0)
    n, d = 8, 32
    inputs = jax.random.normal(key, (n, d), dtype=jnp.float32)
    # 4 identities x 2 samples each -> every row has a positive and a negative
    targets = jnp.array([0, 0, 1, 1, 2, 2, 3, 3], dtype=jnp.int32)

    loss = triplet_loss_pallas(inputs, targets, margin=0.3)
    jax.block_until_ready(loss)

    ref = triplet_loss_ref(inputs, targets, margin=0.3)
    assert jnp.allclose(loss, ref, atol=1e-5, rtol=1e-5), (loss, ref)
    print("KERNEL_OK")
</pallas_src>

<mosaic_0001>
module attributes {stable_mosaic.version = 11 : i64} {
  func.func @_triplet_tile_kernel(%arg0: i32, %arg1: i32, %arg2: memref<128x128xf32, #tpu.memory_space<vmem>>, %arg3: memref<128x128xf32, #tpu.memory_space<vmem>>, %arg4: memref<128x1xi32, #tpu.memory_space<vmem>>, %arg5: memref<1x128xi32, #tpu.memory_space<vmem>>, %arg6: memref<128x1xf32, #tpu.memory_space<vmem>>, %arg7: memref<1x128xf32, #tpu.memory_space<vmem>>, %arg8: memref<128x1xf32, #tpu.memory_space<vmem>>, %arg9: memref<128x128xf32, #tpu.memory_space<vmem>>, %arg10: memref<128x128xf32, #tpu.memory_space<vmem>>) attributes {dimension_semantics = [#tpu.dimension_semantics<parallel>, #tpu.dimension_semantics<arbitrary>], iteration_bounds = array<i64: 1, 1>, scalar_prefetch = 0 : i64, scratch_operands = 2 : i64, tpu.core_type = #tpu.core_type<tc>, window_params = [{transform_indices = @transform_0, window_bounds = array<i64: 128, 128>}, {transform_indices = @transform_1, window_bounds = array<i64: 128, 128>}, {transform_indices = @transform_2, window_bounds = array<i64: 128, 1>}, {transform_indices = @transform_3, window_bounds = array<i64: 1, 128>}, {transform_indices = @transform_4, window_bounds = array<i64: 128, 1>}, {transform_indices = @transform_5, window_bounds = array<i64: 1, 128>}, {transform_indices = @transform_6, window_bounds = array<i64: 128, 1>}]} {
    %c0_i32 = arith.constant 0 : i32
    %0 = arith.cmpi eq, %arg1, %c0_i32 : i32
    %1 = arith.extui %0 : i1 to i32
    %c0_i32_0 = arith.constant 0 : i32
    %2 = arith.cmpi ne, %1, %c0_i32_0 : i32
    scf.if %2 {
      %cst_23 = arith.constant -1.000000e+30 : f32
      %29 = vector.broadcast %cst_23 : f32 to vector<128x128xf32>
      %c0_24 = arith.constant 0 : index
      %c0_25 = arith.constant 0 : index
      %30 = vector.load %arg9[%c0_24, %c0_25] : memref<128x128xf32, #tpu.memory_space<vmem>>, vector<128x128xf32>
      tpu.vector_store %arg9[%c0_24, %c0_25], %29 {strides = array<i32>} : memref<128x128xf32, #tpu.memory_space<vmem>>, vector<128x128xf32>,
      %cst_26 = arith.constant 1.000000e+30 : f32
      %31 = vector.broadcast %cst_26 : f32 to vector<128x128xf32>
      %c0_27 = arith.constant 0 : index
      %c0_28 = arith.constant 0 : index
      %32 = vector.load %arg10[%c0_27, %c0_28] : memref<128x128xf32, #tpu.memory_space<vmem>>, vector<128x128xf32>
      tpu.vector_store %arg10[%c0_27, %c0_28], %31 {strides = array<i32>} : memref<128x128xf32, #tpu.memory_space<vmem>>, vector<128x128xf32>,
    } else {
    }
    %c0 = arith.constant 0 : index
    %c0_1 = arith.constant 0 : index
    %3 = vector.load %arg2[%c0, %c0_1] : memref<128x128xf32, #tpu.memory_space<vmem>>, vector<128x128xf32>
    %c0_2 = arith.constant 0 : index
    %c0_3 = arith.constant 0 : index
    %4 = vector.load %arg3[%c0_2, %c0_3] : memref<128x128xf32, #tpu.memory_space<vmem>>, vector<128x128xf32>
    %cst = arith.constant dense<0.000000e+00> : vector<128x128xf32>
    %5 = tpu.matmul %3, %4, %cst {dimension_numbers = #tpu.dot_dimension_numbers<[1], [1], [0], [0], [0, 0, 1, 0], [], []>} : vector<128x128xf32>, vector<128x128xf32>, vector<128x128xf32> -> vector<128x128xf32>
    %c0_4 = arith.constant 0 : index
    %c0_5 = arith.constant 0 : index
    %6 = vector.load %arg4[%c0_4, %c0_5] : memref<128x1xi32, #tpu.memory_space<vmem>>, vector<128x1xi32>
    %c0_6 = arith.constant 0 : index
    %c0_7 = arith.constant 0 : index
    %7 = vector.load %arg9[%c0_6, %c0_7] : memref<128x128xf32, #tpu.memory_space<vmem>>, vector<128x128xf32>
    %c0_8 = arith.constant 0 : index
    %c0_9 = arith.constant 0 : index
    %8 = vector.load %arg10[%c0_8, %c0_9] : memref<128x128xf32, #tpu.memory_space<vmem>>, vector<128x128xf32>
    %c0_10 = arith.constant 0 : index
    %c0_11 = arith.constant 0 : index
    %9 = vector.load %arg7[%c0_10, %c0_11] : memref<1x128xf32, #tpu.memory_space<vmem>>, vector<1x128xf32>
    %cst_12 = arith.constant 2.000000e+00 : f32
    %10 = vector.broadcast %cst_12 : f32 to vector<128x128xf32>
    %11 = arith.mulf %10, %5 : vector<128x128xf32>
    %12 = vector.broadcast %9 : vector<1x128xf32> to vector<128x128xf32>
    %13 = arith.subf %12, %11 : vector<128x128xf32>
    %c0_13 = arith.constant 0 : index
    %c0_14 = arith.constant 0 : index
    %14 = vector.load %arg5[%c0_13, %c0_14] : memref<1x128xi32, #tpu.memory_space<vmem>>, vector<1x128xi32>
    %15 = vector.broadcast %6 : vector<128x1xi32> to vector<128x128xi32>
    %16 = vector.broadcast %14 : vector<1x128xi32> to vector<128x128xi32>
    %17 = arith.cmpi eq, %15, %16 : vector<128x128xi32>
    %cst_15 = arith.constant -1.000000e+30 : f32
    %18 = vector.broadcast %cst_15 : f32 to vector<128x128xf32>
    %19 = arith.select %17, %13, %18 : vector<128x128xi1>, vector<128x128xf32>
    %20 = arith.maximumf %7, %19 : vector<128x128xf32>
    %cst_16 = arith.constant 1.000000e+30 : f32
    %21 = vector.broadcast %cst_16 : f32 to vector<128x128xf32>
    %22 = arith.select %17, %21, %13 : vector<128x128xi1>, vector<128x128xf32>
    %23 = arith.minimumf %8, %22 : vector<128x128xf32>
    %c0_17 = arith.constant 0 : index
    %c0_18 = arith.constant 0 : index
    %24 = vector.load %arg9[%c0_17, %c0_18] : memref<128x128xf32, #tpu.memory_space<vmem>>, vector<128x128xf32>
    tpu.vector_store %arg9[%c0_17, %c0_18], %20 {strides = array<i32>} : memref<128x128xf32, #tpu.memory_space<vmem>>, vector<128x128xf32>,
    %c0_19 = arith.constant 0 : index
    %c0_20 = arith.constant 0 : index
    %25 = vector.load %arg10[%c0_19, %c0_20] : memref<128x128xf32, #tpu.memory_space<vmem>>, vector<128x128xf32>
    tpu.vector_store %arg10[%c0_19, %c0_20], %23 {strides = array<i32>} : memref<128x128xf32, #tpu.memory_space<vmem>>, vector<128x128xf32>,
    %c0_i32_21 = arith.constant 0 : i32
    %26 = arith.cmpi eq, %arg1, %c0_i32_21 : i32
    %27 = arith.extui %26 : i1 to i32
    %c0_i32_22 = arith.constant 0 : i32
    %28 = arith.cmpi ne, %27, %c0_i32_22 : i32
    scf.if %28 {
      %c0_23 = arith.constant 0 : index
      %c0_24 = arith.constant 0 : index
      %29 = vector.load %arg6[%c0_23, %c0_24] : memref<128x1xf32, #tpu.memory_space<vmem>>, vector<128x1xf32>
      %c0_25 = arith.constant 0 : index
      %c0_26 = arith.constant 0 : index
      %30 = vector.load %arg9[%c0_25, %c0_26] : memref<128x128xf32, #tpu.memory_space<vmem>>, vector<128x128xf32>
      %cst_27 = arith.constant dense<0xFF800000> : vector<128xf32>
      %31 = vector.multi_reduction <maximumf>, %30, %cst_27 [1] : vector<128x128xf32> to vector<128xf32>
      %32 = vector.shape_cast %31 : vector<128xf32> to vector<128x1xf32>
      %33 = arith.addf %29, %32 : vector<128x1xf32>
      %c0_28 = arith.constant 0 : index
      %c0_29 = arith.constant 0 : index
      %34 = vector.load %arg10[%c0_28, %c0_29] : memref<128x128xf32, #tpu.memory_space<vmem>>, vector<128x128xf32>
      %cst_30 = arith.constant dense<0x7F800000> : vector<128xf32>
      %35 = vector.multi_reduction <minimumf>, %34, %cst_30 [1] : vector<128x128xf32> to vector<128xf32>
      %36 = vector.shape_cast %35 : vector<128xf32> to vector<128x1xf32>
      %37 = arith.addf %29, %36 : vector<128x1xf32>
      %cst_31 = arith.constant 9.99999996E-13 : f32
      %38 = vector.broadcast %cst_31 : f32 to vector<128x1xf32>
      %39 = arith.maximumf %33, %38 : vector<128x1xf32>
      %40 = math.sqrt %39 : vector<128x1xf32>
      %cst_32 = arith.constant 9.99999996E-13 : f32
      %41 = vector.broadcast %cst_32 : f32 to vector<128x1xf32>
      %42 = arith.maximumf %37, %41 : vector<128x1xf32>
      %43 = math.sqrt %42 : vector<128x1xf32>
      %44 = arith.subf %40, %43 : vector<128x1xf32>
      %cst_33 = arith.constant 3.000000e-01 : f32
      %45 = vector.broadcast %cst_33 : f32 to vector<128x1xf32>
      %46 = arith.addf %44, %45 : vector<128x1xf32>
      %cst_34 = arith.constant 0.000000e+00 : f32
      %47 = vector.broadcast %cst_34 : f32 to vector<128x1xf32>
      %48 = arith.maximumf %46, %47 : vector<128x1xf32>
      %c0_35 = arith.constant 0 : index
      %c0_36 = arith.constant 0 : index
      %49 = vector.load %arg8[%c0_35, %c0_36] : memref<128x1xf32, #tpu.memory_space<vmem>>, vector<128x1xf32>
      tpu.vector_store %arg8[%c0_35, %c0_36], %48 {strides = array<i32>} : memref<128x1xf32, #tpu.memory_space<vmem>>, vector<128x1xf32>,
    } else {
    }
    return
  }
  func.func @transform_0(%arg0: i32, %arg1: i32) -> (i32, i32) {
    %c0_i32 = arith.constant 0 : i32
    %c0_i32_0 = arith.constant 0 : i32
    return %arg0, %c0_i32 : i32, i32
  }
  func.func @transform_1(%arg0: i32, %arg1: i32) -> (i32, i32) {
    %c0_i32 = arith.constant 0 : i32
    %c0_i32_0 = arith.constant 0 : i32
    return %arg1, %c0_i32 : i32, i32
  }
  func.func @transform_2(%arg0: i32, %arg1: i32) -> (i32, i32) {
    %c0_i32 = arith.constant 0 : i32
    %c0_i32_0 = arith.constant 0 : i32
    return %arg0, %c0_i32 : i32, i32
  }
  func.func @transform_3(%arg0: i32, %arg1: i32) -> (i32, i32) {
    %c0_i32 = arith.constant 0 : i32
    %c0_i32_0 = arith.constant 0 : i32
    return %c0_i32, %arg1 : i32, i32
  }
  func.func @transform_4(%arg0: i32, %arg1: i32) -> (i32, i32) {
    %c0_i32 = arith.constant 0 : i32
    %c0_i32_0 = arith.constant 0 : i32
    return %arg0, %c0_i32 : i32, i32
  }
  func.func @transform_5(%arg0: i32, %arg1: i32) -> (i32, i32) {
    %c0_i32 = arith.constant 0 : i32
    %c0_i32_0 = arith.constant 0 : i32
    return %c0_i32, %arg1 : i32, i32
  }
  func.func @transform_6(%arg0: i32, %arg1: i32) -> (i32, i32) {
    %c0_i32 = arith.constant 0 : i32
    %c0_i32_0 = arith.constant 0 : i32
    return %arg0, %c0_i32 : i32, i32
  }
}

</mosaic_0001>

<llo_original>
// kernel: tpu_custom_call.1
$region0: #{tpu_custom_call.1}
  #allocation0 [shape = 'u32[]', space=smem, size = 0x4, offset = 0x4, fixed_abs, tag = 'smem constant byte address 0x4 - core index']
  #allocation1 [shape = 'u32[144,128]{1,0:T(1,128)}', space=vmem, size = 0x12000, scoped, tag = 'internal scratch']
  #allocation2 [shape = 'f32[128,128]{1,0:T(8,128)}', space=vmem, size = 0x10000, scoped, tag = 'scratch operand']
  #allocation3 [shape = 'f32[128,128]{1,0:T(8,128)}', space=vmem, size = 0x10000, scoped, tag = 'scratch operand']
  %s0 = inlined_call_operand.vmem [shape: f32[128,128], index: 0, kind: input, shape index: {}]
  %s1 = inlined_call_operand.vmem [shape: f32[128,128], index: 1, kind: input, shape index: {}]
  %s2 = inlined_call_operand.vmem [shape: s32[128,1], index: 2, kind: input, shape index: {}]
  %s3 = inlined_call_operand.vmem [shape: s32[1,128], index: 3, kind: input, shape index: {}]
  %s4 = inlined_call_operand.vmem [shape: f32[128,1], index: 4, kind: input, shape index: {}]
  %s5 = inlined_call_operand.vmem [shape: f32[1,128], index: 5, kind: input, shape index: {}]
  %s6 = inlined_call_operand.vmem [shape: f32[128,1], index: 6, kind: output, shape index: {}]
  %s7 = sld [smem:[#allocation0]]
  $region42: #{tpu_custom_call.1} parent=0
    _
  %s9 = ssub.s32 1, %s7
  %s10 = scalar_select 0, %s9, %s7
  // Predicated region
  $region2: #{tpu_custom_call.1} parent=0 // pred_check
    _
  $region3: #{tpu_custom_call.1} parent=0 // pred_check_branch
    %12 = sbr.rel (0) target = $region5
  $region4: #{tpu_custom_call.1} parent=0 // pred_region
    _
  $region5: #{tpu_custom_call.1} parent=0 // pred_fallthru
    _
  // Predicated region
  $region6: #{tpu_custom_call.1} parent=0 // pred_check
    _
  $region7: #{tpu_custom_call.1} parent=0 // pred_check_branch
    %14 = sbr.rel (0) target = $region9
  $region8: #{tpu_custom_call.1} parent=0 // pred_region
    _
  $region9: #{tpu_custom_call.1} parent=0 // pred_fallthru
    _
  // Predicated region
  $region10: #{tpu_custom_call.1} parent=0 // pred_check
    _
  $region11: #{tpu_custom_call.1} parent=0 // pred_check_branch
    %16 = sbr.rel (0) target = $region13
  $region12: #{tpu_custom_call.1} parent=0 // pred_region
    _
  $region13: #{tpu_custom_call.1} parent=0 // pred_fallthru
    _
  // Predicated region
  $region14: #{tpu_custom_call.1} parent=0 // pred_check
    _
  $region15: #{tpu_custom_call.1} parent=0 // pred_check_branch
    %18 = sbr.rel (0) target = $region17
  $region16: #{tpu_custom_call.1} parent=0 // pred_region
    _
  $region17: #{tpu_custom_call.1} parent=0 // pred_fallthru
    _
  // Predicated region
  $region18: #{tpu_custom_call.1} parent=0 // pred_check
    _
  $region19: #{tpu_custom_call.1} parent=0 // pred_check_branch
    %20 = sbr.rel (0) target = $region21
  $region20: #{tpu_custom_call.1} parent=0 // pred_region
    _
  $region21: #{tpu_custom_call.1} parent=0 // pred_fallthru
    _
  // Predicated region
  $region22: #{tpu_custom_call.1} parent=0 // pred_check
    _
  $region23: #{tpu_custom_call.1} parent=0 // pred_check_branch
    %22 = sbr.rel (0) target = $region25
  $region24: #{tpu_custom_call.1} parent=0 // pred_region
    _
  $region25: #{tpu_custom_call.1} parent=0 // pred_fallthru
    _
  %p23 = scmp.eq.s32.totalorder 0, 0
  // Predicated region
  $region26: #{tpu_custom_call.1} parent=0 // pred_check
    %p24 = pneg %p23
  $region27: #{tpu_custom_call.1} parent=0 // pred_check_branch
    %26 = sbr.rel (%p24) target = $region29
  $region28: #{tpu_custom_call.1} parent=0 // pred_region
    %27 = vst [vmem:[#allocation2] sm:$0xff] -1e+30
    %28 = vst [vmem:[#allocation2 + $0x8] sm:$0xff] -1e+30
    %29 = vst [vmem:[#allocation2 + $0x10] sm:$0xff] -1e+30
    %30 = vst [vmem:[#allocation2 + $0x18] sm:$0xff] -1e+30
    %31 = vst [vmem:[#allocation2 + $0x20] sm:$0xff] -1e+30
    %32 = vst [vmem:[#allocation2 + $0x28] sm:$0xff] -1e+30
    %33 = vst [vmem:[#allocation2 + $0x30] sm:$0xff] -1e+30
    %34 = vst [vmem:[#allocation2 + $0x38] sm:$0xff] -1e+30
    %35 = vst [vmem:[#allocation2 + $0x40] sm:$0xff] -1e+30
    %36 = vst [vmem:[#allocation2 + $0x48] sm:$0xff] -1e+30
    %37 = vst [vmem:[#allocation2 + $0x50] sm:$0xff] -1e+30
    %38 = vst [vmem:[#allocation2 + $0x58] sm:$0xff] -1e+30
    %39 = vst [vmem:[#allocation2 + $0x60] sm:$0xff] -1e+30
    %40 = vst [vmem:[#allocation2 + $0x68] sm:$0xff] -1e+30
    %41 = vst [vmem:[#allocation2 + $0x70] sm:$0xff] -1e+30
    %42 = vst [vmem:[#allocation2 + $0x78] sm:$0xff] -1e+30
    %43 = vst [vmem:[#allocation3] sm:$0xff] 1e+30
    %44 = vst [vmem:[#allocation3 + $0x8] sm:$0xff] 1e+30
    %45 = vst [vmem:[#allocation3 + $0x10] sm:$0xff] 1e+30
    %46 = vst [vmem:[#allocation3 + $0x18] sm:$0xff] 1e+30
    %47 = vst [vmem:[#allocation3 + $0x20] sm:$0xff] 1e+30
    %48 = vst [vmem:[#allocation3 + $0x28] sm:$0xff] 1e+30
    %49 = vst [vmem:[#allocation3 + $0x30] sm:$0xff] 1e+30
    %50 = vst [vmem:[#allocation3 + $0x38] sm:$0xff] 1e+30
    %51 = vst [vmem:[#allocation3 + $0x40] sm:$0xff] 1e+30
    %52 = vst [vmem:[#allocation3 + $0x48] sm:$0xff] 1e+30
    %53 = vst [vmem:[#allocation3 + $0x50] sm:$0xff] 1e+30
    %54 = vst [vmem:[#allocation3 + $0x58] sm:$0xff] 1e+30
    %55 = vst [vmem:[#allocation3 + $0x60] sm:$0xff] 1e+30
    %56 = vst [vmem:[#allocation3 + $0x68] sm:$0xff] 1e+30
    %57 = vst [vmem:[#allocation3 + $0x70] sm:$0xff] 1e+30
    %58 = vst [vmem:[#allocation3 + $0x78] sm:$0xff] 1e+30
  $region29: #{tpu_custom_call.1} parent=0 // pred_fallthru
    _
  %v59 = vld [vmem:[%s0] sm:$0xff]
  %v60 = vld [vmem:[%s0 + $0x8] sm:$0xff]
  %v61 = vld [vmem:[%s0 + $0x10] sm:$0xff]
  %v62 = vld [vmem:[%s0 + $0x18] sm:$0xff]
  %v63 = vld [vmem:[%s0 + $0x20] sm:$0xff]
  %v64 = vld [vmem:[%s0 + $0x28] sm:$0xff]
  %v65 = vld [vmem:[%s0 + $0x30] sm:$0xff]
  %v66 = vld [vmem:[%s0 + $0x38] sm:$0xff]
  %v67 = vld [vmem:[%s0 + $0x40] sm:$0xff]
  %v68 = vld [vmem:[%s0 + $0x48] sm:$0xff]
  %v69 = vld [vmem:[%s0 + $0x50] sm:$0xff]
  %v70 = vld [vmem:[%s0 + $0x58] sm:$0xff]
  %v71 = vld [vmem:[%s0 + $0x60] sm:$0xff]
  %v72 = vld [vmem:[%s0 + $0x68] sm:$0xff]
  %v73 = vld [vmem:[%s0 + $0x70] sm:$0xff]
  %v74 = vld [vmem:[%s0 + $0x78] sm:$0xff]
  %v75 = vld [vmem:[%s1] sm:$0xff]
  %v76 = vld [vmem:[%s1 + $0x8] sm:$0xff]
  %v77 = vld [vmem:[%s1 + $0x10] sm:$0xff]
  %v78 = vld [vmem:[%s1 + $0x18] sm:$0xff]
  %v79 = vld [vmem:[%s1 + $0x20] sm:$0xff]
  %v80 = vld [vmem:[%s1 + $0x28] sm:$0xff]
  %v81 = vld [vmem:[%s1 + $0x30] sm:$0xff]
  %v82 = vld [vmem:[%s1 + $0x38] sm:$0xff]
  %v83 = vld [vmem:[%s1 + $0x40] sm:$0xff]
  %v84 = vld [vmem:[%s1 + $0x48] sm:$0xff]
  %v85 = vld [vmem:[%s1 + $0x50] sm:$0xff]
  %v86 = vld [vmem:[%s1 + $0x58] sm:$0xff]
  %v87 = vld [vmem:[%s1 + $0x60] sm:$0xff]
  %v88 = vld [vmem:[%s1 + $0x68] sm:$0xff]
  %v89 = vld [vmem:[%s1 + $0x70] sm:$0xff]
  %v90 = vld [vmem:[%s1 + $0x78] sm:$0xff]
  %91 = vmatprep.subr.mxu0 0.0
  %92 = vmatpush1.xpose.msra.mxu0 %v75
  %93 = vmatprep.subr.mxu0 0.0
  %94 = vmatpush1.xpose.msra.mxu0 %v76
  %95 = vmatprep.subr.mxu0 0.0
  %96 = vmatpush1.xpose.msra.mxu0 %v77
  %97 = vmatprep.subr.mxu0 0.0
  %98 = vmatpush1.xpose.msra.mxu0 %v78
  %99 = vmatprep.subr.mxu0 0.0
  %100 = vmatpush1.xpose.msra.mxu0 %v79
  %101 = vmatprep.subr.mxu0 0.0
  %102 = vmatpush1.xpose.msra.mxu0 %v80
  %103 = vmatprep.subr.mxu0 0.0
  %104 = vmatpush1.xpose.msra.mxu0 %v81
  %105 = vmatprep.subr.mxu0 0.0
  %106 = vmatpush1.xpose.msra.mxu0 %v82
  %107 = vmatprep.subr.mxu0 0.0
  %108 = vmatpush1.xpose.msra.mxu0 %v83
  %109 = vmatprep.subr.mxu0 0.0
  %110 = vmatpush1.xpose.msra.mxu0 %v84
  %111 = vmatprep.subr.mxu0 0.0
  %112 = vmatpush1.xpose.msra.mxu0 %v85
  %113 = vmatprep.subr.mxu0 0.0
  %114 = vmatpush1.xpose.msra.mxu0 %v86
  %115 = vmatprep.subr.mxu0 0.0
  %116 = vmatpush1.xpose.msra.mxu0 %v87
  %117 = vmatprep.subr.mxu0 0.0
  %118 = vmatpush1.xpose.msra.mxu0 %v88
  %119 = vmatprep.subr.mxu0 0.0
  %120 = vmatpush1.xpose.msra.mxu0 %v89
  %121 = vmatprep.subr.mxu0 0.0
  %122 = vmatpush1.xpose.msra.mxu0 %v90
  %123 = vmatprep.subr.mxu0 0.0
  %124 = vmatpush1.xpose.msra.mxu0 0.0
  %125 = vmatprep.subr.mxu0 0.0
  %126 = vmatpush1.xpose.msra.mxu0 0.0
  %127 = vmatprep.subr.mxu0 0.0
  %128 = vmatpush1.xpose.msra.mxu0 0.0
  %129 = vmatprep.subr.mxu0 0.0
  %130 = vmatpush1.xpose.msra.mxu0 0.0
  %131 = vmatprep.subr.mxu0 0.0
  %132 = vmatpush1.xpose.msra.mxu0 0.0
  %133 = vmatprep.subr.mxu0 0.0
  %134 = vmatpush1.xpose.msra.mxu0 0.0
  %135 = vmatprep.subr.mxu0 0.0
  %136 = vmatpush1.xpose.msra.mxu0 0.0
  %137 = vmatprep.subr.mxu0 0.0
  %138 = vmatpush1.xpose.msra.mxu0 0.0
  %139 = vmatprep.subr.mxu0 0.0
  %140 = vmatpush1.xpose.msra.mxu0 0.0
  %141 = vmatprep.subr.mxu0 0.0
  %142 = vmatpush1.xpose.msra.mxu0 0.0
  %143 = vmatprep.subr.mxu0 0.0
  %144 = vmatpush1.xpose.msra.mxu0 0.0
  %145 = vmatprep.subr.mxu0 0.0
  %146 = vmatpush1.xpose.msra.mxu0 0.0
  %147 = vmatprep.subr.mxu0 0.0
  %148 = vmatpush1.xpose.msra.mxu0 0.0
  %149 = vmatprep.subr.mxu0 0.0
  %150 = vmatpush1.xpose.msra.mxu0 0.0
  %151 = vmatprep.subr.mxu0 0.0
  %152 = vmatpush1.xpose.msra.mxu0 0.0
  %153 = vmatprep.subr.mxu0 0.0
  %154 = vmatpush1.xpose.msra.mxu0 0.0
  %155 = vmatprep.mubr.f32.mxu0 0.0
  %156 = vmatmul.mubr.f32.gmra.mrb[0].mxu0 %v59
  %v157 = vpop.f32.mrb[0].mxu0
  %v158 = vadd.f32 0.0, %v157
  %v159 = vpop.f32.mrb[0].mxu0
  %160 = vmatprep.mubr.f32.mxu0 0.0
  %161 = vmatmul.mubr.f32.gmra.mrb[0].mxu0 %v60
  %v162 = vpop.f32.mrb[0].mxu0
  %v163 = vadd.f32 0.0, %v162
  %v164 = vpop.f32.mrb[0].mxu0
  %165 = vmatprep.mubr.f32.mxu0 0.0
  %166 = vmatmul.mubr.f32.gmra.mrb[0].mxu0 %v61
  %v167 = vpop.f32.mrb[0].mxu0
  %v168 = vadd.f32 0.0, %v167
  %v169 = vpop.f32.mrb[0].mxu0
  %170 = vmatprep.mubr.f32.mxu0 0.0
  %171 = vmatmul.mubr.f32.gmra.mrb[0].mxu0 %v62
  %v172 = vpop.f32.mrb[0].mxu0
  %v173 = vadd.f32 0.0, %v172
  %v174 = vpop.f32.mrb[0].mxu0
  %175 = vmatprep.mubr.f32.mxu0 0.0
  %176 = vmatmul.mubr.f32.gmra.mrb[0].mxu0 %v63
  %v177 = vpop.f32.mrb[0].mxu0
  %v178 = vadd.f32 0.0, %v177
  %v179 = vpop.f32.mrb[0].mxu0
  %180 = vmatprep.mubr.f32.mxu0 0.0
  %181 = vmatmul.mubr.f32.gmra.mrb[0].mxu0 %v64
  %v182 = vpop.f32.mrb[0].mxu0
  %v183 = vadd.f32 0.0, %v182
  %v184 = vpop.f32.mrb[0].mxu0
  %185 = vmatprep.mubr.f32.mxu0 0.0
  %186 = vmatmul.mubr.f32.gmra.mrb[0].mxu0 %v65
  %v187 = vpop.f32.mrb[0].mxu0
  %v188 = vadd.f32 0.0, %v187
  %v189 = vpop.f32.mrb[0].mxu0
  %190 = vmatprep.mubr.f32.mxu0 0.0
  %191 = vmatmul.mubr.f32.gmra.mrb[0].mxu0 %v66
  %v192 = vpop.f32.mrb[0].mxu0
  %v193 = vadd.f32 0.0, %v192
  %v194 = vpop.f32.mrb[0].mxu0
  %195 = vmatprep.mubr.f32.mxu0 0.0
  %196 = vmatmul.mubr.f32.gmra.mrb[0].mxu0 %v67
  %v197 = vpop.f32.mrb[0].mxu0
  %v198 = vadd.f32 0.0, %v197
  %v199 = vpop.f32.mrb[0].mxu0
  %200 = vmatprep.mubr.f32.mxu0 0.0
  %201 = vmatmul.mubr.f32.gmra.mrb[0].mxu0 %v68
  %v202 = vpop.f32.mrb[0].mxu0
  %v203 = vadd.f32 0.0, %v202
  %v204 = vpop.f32.mrb[0].mxu0
  %205 = vmatprep.mubr.f32.mxu0 0.0
  %206 = vmatmul.mubr.f32.gmra.mrb[0].mxu0 %v69
  %v207 = vpop.f32.mrb[0].mxu0
  %v208 = vadd.f32 0.0, %v207
  %v209 = vpop.f32.mrb[0].mxu0
  %210 = vmatprep.mubr.f32.mxu0 0.0
  %211 = vmatmul.mubr.f32.gmra.mrb[0].mxu0 %v70
  %v212 = vpop.f32.mrb[0].mxu0
  %v213 = vadd.f32 0.0, %v212
  %v214 = vpop.f32.mrb[0].mxu0
  %215 = vmatprep.mubr.f32.mxu0 0.0
  %216 = vmatmul.mubr.f32.gmra.mrb[0].mxu0 %v71
  %v217 = vpop.f32.mrb[0].mxu0
  %v218 = vadd.f32 0.0, %v217
  %v219 = vpop.f32.mrb[0].mxu0
  %220 = vmatprep.mubr.f32.mxu0 0.0
  %221 = vmatmul.mubr.f32.gmra.mrb[0].mxu0 %v72
  %v222 = vpop.f32.mrb[0].mxu0
  %v223 = vadd.f32 0.0, %v222
  %v224 = vpop.f32.mrb[0].mxu0
  %225 = vmatprep.mubr.f32.mxu0 0.0
  %226 = vmatmul.mubr.f32.gmra.mrb[0].mxu0 %v73
  %v227 = vpop.f32.mrb[0].mxu0
  %v228 = vadd.f32 0.0, %v227
  %v229 = vpop.f32.mrb[0].mxu0
  %230 = vmatprep.mubr.f32.mxu0 0.0
  %231 = vmatmul.mubr.f32.gmra.mrb[0].mxu0 %v74
  %v232 = vpop.f32.mrb[0].mxu0
  %v233 = vadd.f32 0.0, %v232
  %v234 = vpop.f32.mrb[0].mxu0
  %235 = vdwg.mxu0
  %v236 = vld [vmem:[%s2] sm:$0xff]
  %v237 = vld [vmem:[%s2 + $0x8] sm:$0xff]
  %v238 = vld [vmem:[%s2 + $0x10] sm:$0xff]
  %v239 = vld [vmem:[%s2 + $0x18] sm:$0xff]
  %v240 = vld [vmem:[%s2 + $0x20] sm:$0xff]
  %v241 = vld [vmem:[%s2 + $0x28] sm:$0xff]
  %v242 = vld [vmem:[%s2 + $0x30] sm:$0xff]
  %v243 = vld [vmem:[%s2 + $0x38] sm:$0xff]
  %v244 = vld [vmem:[%s2 + $0x40] sm:$0xff]
  %v245 = vld [vmem:[%s2 + $0x48] sm:$0xff]
  %v246 = vld [vmem:[%s2 + $0x50] sm:$0xff]
  %v247 = vld [vmem:[%s2 + $0x58] sm:$0xff]
  %v248 = vld [vmem:[%s2 + $0x60] sm:$0xff]
  %v249 = vld [vmem:[%s2 + $0x68] sm:$0xff]
  %v250 = vld [vmem:[%s2 + $0x70] sm:$0xff]
  %v251 = vld [vmem:[%s2 + $0x78] sm:$0xff]
  %v252 = vld [vmem:[#allocation2] sm:$0xff]
  %v253 = vld [vmem:[#allocation2 + $0x8] sm:$0xff]
  %v254 = vld [vmem:[#allocation2 + $0x10] sm:$0xff]
  %v255 = vld [vmem:[#allocation2 + $0x18] sm:$0xff]
  %v256 = vld [vmem:[#allocation2 + $0x20] sm:$0xff]
  %v257 = vld [vmem:[#allocation2 + $0x28] sm:$0xff]
  %v258 = vld [vmem:[#allocation2 + $0x30] sm:$0xff]
  %v259 = vld [vmem:[#allocation2 + $0x38] sm:$0xff]
  %v260 = vld [vmem:[#allocation2 + $0x40] sm:$0xff]
  %v261 = vld [vmem:[#allocation2 + $0x48] sm:$0xff]
  %v262 = vld [vmem:[#allocation2 + $0x50] sm:$0xff]
  %v263 = vld [vmem:[#allocation2 + $0x58] sm:$0xff]
  %v264 = vld [vmem:[#allocation2 + $0x60] sm:$0xff]
  %v265 = vld [vmem:[#allocation2 + $0x68] sm:$0xff]
  %v266 = vld [vmem:[#allocation2 + $0x70] sm:$0xff]
  %v267 = vld [vmem:[#allocation2 + $0x78] sm:$0xff]
  %v268 = vld [vmem:[#allocation3] sm:$0xff]
  %v269 = vld [vmem:[#allocation3 + $0x8] sm:$0xff]
  %v270 = vld [vmem:[#allocation3 + $0x10] sm:$0xff]
  %v271 = vld [vmem:[#allocation3 + $0x18] sm:$0xff]
  %v272 = vld [vmem:[#allocation3 + $0x20] sm:$0xff]
  %v273 = vld [vmem:[#allocation3 + $0x28] sm:$0xff]
  %v274 = vld [vmem:[#allocation3 + $0x30] sm:$0xff]
  %v275 = vld [vmem:[#allocation3 + $0x38] sm:$0xff]
  %v276 = vld [vmem:[#allocation3 + $0x40] sm:$0xff]
  %v277 = vld [vmem:[#allocation3 + $0x48] sm:$0xff]
  %v278 = vld [vmem:[#allocation3 + $0x50] sm:$0xff]
  %v279 = vld [vmem:[#allocation3 + $0x58] sm:$0xff]
  %v280 = vld [vmem:[#allocation3 + $0x60] sm:$0xff]
  %v281 = vld [vmem:[#allocation3 + $0x68] sm:$0xff]
  %v282 = vld [vmem:[#allocation3 + $0x70] sm:$0xff]
  %v283 = vld [vmem:[#allocation3 + $0x78] sm:$0xff]
  %v284 = vld [vmem:[%s5] sm:$0x1]
  %v285 = vmul.f32 %v158, 2.0
  %v286 = vmul.f32 %v163, 2.0
  %v287 = vmul.f32 %v168, 2.0
  %v288 = vmul.f32 %v173, 2.0
  %v289 = vmul.f32 %v178, 2.0
  %v290 = vmul.f32 %v183, 2.0
  %v291 = vmul.f32 %v188, 2.0
  %v292 = vmul.f32 %v193, 2.0
  %v293 = vmul.f32 %v198, 2.0
  %v294 = vmul.f32 %v203, 2.0
  %v295 = vmul.f32 %v208, 2.0
  %v296 = vmul.f32 %v213, 2.0
  %v297 = vmul.f32 %v218, 2.0
  %v298 = vmul.f32 %v223, 2.0
  %v299 = vmul.f32 %v228, 2.0
  %v300 = vmul.f32 %v233, 2.0
  %v302 = vlaneseq
  %v303 = vshrl.u32 %v302, 7
  %v304 = vsub.s32 0, %v303
  %v305 = vrot.slane %v284, %v304
  %v307 = vsub.f32 %v305, %v285
  %v308 = vsub.f32 %v305, %v286
  %v309 = vsub.f32 %v305, %v287
  %v310 = vsub.f32 %v305, %v288
  %v311 = vsub.f32 %v305, %v289
  %v312 = vsub.f32 %v305, %v290
  %v313 = vsub.f32 %v305, %v291
  %v314 = vsub.f32 %v305, %v292
  %v315 = vsub.f32 %v305, %v293
  %v316 = vsub.f32 %v305, %v294
  %v317 = vsub.f32 %v305, %v295
  %v318 = vsub.f32 %v305, %v296
  %v319 = vsub.f32 %v305, %v297
  %v320 = vsub.f32 %v305, %v298
  %v321 = vsub.f32 %v305, %v299
  %v322 = vsub.f32 %v305, %v300
  %v323 = vld [vmem:[%s3] sm:$0x1]
  %324 = vset.pattern.permute.xlu0 0
  %325 = vperm.xlu0 %324, %v236
  %v326 = vpop.permute.xlu0 %325
  %327 = vset.pattern.permute.xlu0 0
  %328 = vperm.xlu0 %327, %v237
  %v329 = vpop.permute.xlu0 %328
  %330 = vset.pattern.permute.xlu0 0
  %331 = vperm.xlu0 %330, %v238
  %v332 = vpop.permute.xlu0 %331
  %333 = vset.pattern.permute.xlu0 0
  %334 = vperm.xlu0 %333, %v239
  %v335 = vpop.permute.xlu0 %334
  %336 = vset.pattern.permute.xlu0 0
  %337 = vperm.xlu0 %336, %v240
  %v338 = vpop.permute.xlu0 %337
  %339 = vset.pattern.permute.xlu0 0
  %340 = vperm.xlu0 %339, %v241
  %v341 = vpop.permute.xlu0 %340
  %342 = vset.pattern.permute.xlu0 0
  %343 = vperm.xlu0 %342, %v242
  %v344 = vpop.permute.xlu0 %343
  %345 = vset.pattern.permute.xlu0 0
  %346 = vperm.xlu0 %345, %v243
  %v347 = vpop.permute.xlu0 %346
  %348 = vset.pattern.permute.xlu0 0
  %349 = vperm.xlu0 %348, %v244
  %v350 = vpop.permute.xlu0 %349
  %351 = vset.pattern.permute.xlu0 0
  %352 = vperm.xlu0 %351, %v245
  %v353 = vpop.permute.xlu0 %352
  %354 = vset.pattern.permute.xlu0 0
  %355 = vperm.xlu0 %354, %v246
  %v356 = vpop.permute.xlu0 %355
  %357 = vset.pattern.permute.xlu0 0
  %358 = vperm.xlu0 %357, %v247
  %v359 = vpop.permute.xlu0 %358
  %360 = vset.pattern.permute.xlu0 0
  %361 = vperm.xlu0 %360, %v248
  %v362 = vpop.permute.xlu0 %361
  %363 = vset.pattern.permute.xlu0 0
  %364 = vperm.xlu0 %363, %v249
  %v365 = vpop.permute.xlu0 %364
  %366 = vset.pattern.permute.xlu0 0
  %367 = vperm.xlu0 %366, %v250
  %v368 = vpop.permute.xlu0 %367
  %369 = vset.pattern.permute.xlu0 0
  %370 = vperm.xlu0 %369, %v251
  %v371 = vpop.permute.xlu0 %370
  %v372 = vlaneseq
  %v373 = vshrl.u32 %v372, 7
  %v374 = vsub.s32 0, %v373
  %v375 = vrot.slane %v323, %v374
  %vm376 = vcmp.eq.s32.totalorder %v326, %v375
  %vm377 = vcmp.eq.s32.totalorder %v329, %v375
  %vm378 = vcmp.eq.s32.totalorder %v332, %v375
  %vm379 = vcmp.eq.s32.totalorder %v335, %v375
  %vm380 = vcmp.eq.s32.totalorder %v338, %v375
  %vm381 = vcmp.eq.s32.totalorder %v341, %v375
  %vm382 = vcmp.eq.s32.totalorder %v344, %v375
  %vm383 = vcmp.eq.s32.totalorder %v347, %v375
  %vm384 = vcmp.eq.s32.totalorder %v350, %v375
  %vm385 = vcmp.eq.s32.totalorder %v353, %v375
  %vm386 = vcmp.eq.s32.totalorder %v356, %v375
  %vm387 = vcmp.eq.s32.totalorder %v359, %v375
  %vm388 = vcmp.eq.s32.totalorder %v362, %v375
  %vm389 = vcmp.eq.s32.totalorder %v365, %v375
  %vm390 = vcmp.eq.s32.totalorder %v368, %v375
  %vm391 = vcmp.eq.s32.totalorder %v371, %v375
  %v392 = vsel %vm376, %v307, -1e+30
  %v393 = vsel %vm377, %v308, -1e+30
  %v394 = vsel %vm378, %v309, -1e+30
  %v395 = vsel %vm379, %v310, -1e+30
  %v396 = vsel %vm380, %v311, -1e+30
  %v397 = vsel %vm381, %v312, -1e+30
  %v398 = vsel %vm382, %v313, -1e+30
  %v399 = vsel %vm383, %v314, -1e+30
  %v400 = vsel %vm384, %v315, -1e+30
  %v401 = vsel %vm385, %v316, -1e+30
  %v402 = vsel %vm386, %v317, -1e+30
  %v403 = vsel %vm387, %v318, -1e+30
  %v404 = vsel %vm388, %v319, -1e+30
  %v405 = vsel %vm389, %v320, -1e+30
  %v406 = vsel %vm390, %v321, -1e+30
  %v407 = vsel %vm391, %v322, -1e+30
  %v408 = vmax.f32 %v252, %v392
  %v409 = vmax.f32 %v253, %v393
  %v410 = vmax.f32 %v254, %v394
  %v411 = vmax.f32 %v255, %v395
  %v412 = vmax.f32 %v256, %v396
  %v413 = vmax.f32 %v257, %v397
  %v414 = vmax.f32 %v258, %v398
  %v415 = vmax.f32 %v259, %v399
  %v416 = vmax.f32 %v260, %v400
  %v417 = vmax.f32 %v261, %v401
  %v418 = vmax.f32 %v262, %v402
  %v419 = vmax.f32 %v263, %v403
  %v420 = vmax.f32 %v264, %v404
  %v421 = vmax.f32 %v265, %v405
  %v422 = vmax.f32 %v266, %v406
  %v423 = vmax.f32 %v267, %v407
  %v424 = vsel %vm376, 1e+30, %v307
  %v425 = vsel %vm377, 1e+30, %v308
  %v426 = vsel %vm378, 1e+30, %v309
  %v427 = vsel %vm379, 1e+30, %v310
  %v428 = vsel %vm380, 1e+30, %v311
  %v429 = vsel %vm381, 1e+30, %v312
  %v430 = vsel %vm382, 1e+30, %v313
  %v431 = vsel %vm383, 1e+30, %v314
  %v432 = vsel %vm384, 1e+30, %v315
  %v433 = vsel %vm385, 1e+30, %v316
  %v434 = vsel %vm386, 1e+30, %v317
  %v435 = vsel %vm387, 1e+30, %v318
  %v436 = vsel %vm388, 1e+30, %v319
  %v437 = vsel %vm389, 1e+30, %v320
  %v438 = vsel %vm390, 1e+30, %v321
  %v439 = vsel %vm391, 1e+30, %v322
  %v440 = vmin.f32 %v268, %v424
  %v441 = vmin.f32 %v269, %v425
  %v442 = vmin.f32 %v270, %v426
  %v443 = vmin.f32 %v271, %v427
  %v444 = vmin.f32 %v272, %v428
  %v445 = vmin.f32 %v273, %v429
  %v446 = vmin.f32 %v274, %v430
  %v447 = vmin.f32 %v275, %v431
  %v448 = vmin.f32 %v276, %v432
  %v449 = vmin.f32 %v277, %v433
  %v450 = vmin.f32 %v278, %v434
  %v451 = vmin.f32 %v279, %v435
  %v452 = vmin.f32 %v280, %v436
  %v453 = vmin.f32 %v281, %v437
  %v454 = vmin.f32 %v282, %v438
  %v455 = vmin.f32 %v283, %v439
  %456 = vst [vmem:[#allocation2] sm:$0xff] %v408
  %457 = vst [vmem:[#allocation2 + $0x8] sm:$0xff] %v409
  %458 = vst [vmem:[#allocation2 + $0x10] sm:$0xff] %v410
  %459 = vst [vmem:[#allocation2 + $0x18] sm:$0xff] %v411
  %460 = vst [vmem:[#allocation2 + $0x20] sm:$0xff] %v412
  %461 = vst [vmem:[#allocation2 + $0x28] sm:$0xff] %v413
  %462 = vst [vmem:[#allocation2 + $0x30] sm:$0xff] %v414
  %463 = vst [vmem:[#allocation2 + $0x38] sm:$0xff] %v415
  %464 = vst [vmem:[#allocation2 + $0x40] sm:$0xff] %v416
  %465 = vst [vmem:[#allocation2 + $0x48] sm:$0xff] %v417
  %466 = vst [vmem:[#allocation2 + $0x50] sm:$0xff] %v418
  %467 = vst [vmem:[#allocation2 + $0x58] sm:$0xff] %v419
  %468 = vst [vmem:[#allocation2 + $0x60] sm:$0xff] %v420
  %469 = vst [vmem:[#allocation2 + $0x68] sm:$0xff] %v421
  %470 = vst [vmem:[#allocation2 + $0x70] sm:$0xff] %v422
  %471 = vst [vmem:[#allocation2 + $0x78] sm:$0xff] %v423
  %472 = vst [vmem:[#allocation3] sm:$0xff] %v440
  %473 = vst [vmem:[#allocation3 + $0x8] sm:$0xff] %v441
  %474 = vst [vmem:[#allocation3 + $0x10] sm:$0xff] %v442
  %475 = vst [vmem:[#allocation3 + $0x18] sm:$0xff] %v443
  %476 = vst [vmem:[#allocation3 + $0x20] sm:$0xff] %v444
  %477 = vst [vmem:[#allocation3 + $0x28] sm:$0xff] %v445
  %478 = vst [vmem:[#allocation3 + $0x30] sm:$0xff] %v446
  %479 = vst [vmem:[#allocation3 + $0x38] sm:$0xff] %v447
  %480 = vst [vmem:[#allocation3 + $0x40] sm:$0xff] %v448
  %481 = vst [vmem:[#allocation3 + $0x48] sm:$0xff] %v449
  %482 = vst [vmem:[#allocation3 + $0x50] sm:$0xff] %v450
  %483 = vst [vmem:[#allocation3 + $0x58] sm:$0xff] %v451
  %484 = vst [vmem:[#allocation3 + $0x60] sm:$0xff] %v452
  %485 = vst [vmem:[#allocation3 + $0x68] sm:$0xff] %v453
  %486 = vst [vmem:[#allocation3 + $0x70] sm:$0xff] %v454
  %487 = vst [vmem:[#allocation3 + $0x78] sm:$0xff] %v455
  // Predicated region
  $region30: #{tpu_custom_call.1} parent=0 // pred_check
    %p488 = pneg %p23
  $region31: #{tpu_custom_call.1} parent=0 // pred_check_branch
    %490 = sbr.rel (%p488) target = $region33
  $region32: #{tpu_custom_call.1} parent=0 // pred_region
    %v491 = vld [vmem:[%s4] sm:$0xff]
    %v492 = vld [vmem:[%s4 + $0x8] sm:$0xff]
    %v493 = vld [vmem:[%s4 + $0x10] sm:$0xff]
    %v494 = vld [vmem:[%s4 + $0x18] sm:$0xff]
    %v495 = vld [vmem:[%s4 + $0x20] sm:$0xff]
    %v496 = vld [vmem:[%s4 + $0x28] sm:$0xff]
    %v497 = vld [vmem:[%s4 + $0x30] sm:$0xff]
    %v498 = vld [vmem:[%s4 + $0x38] sm:$0xff]
    %v499 = vld [vmem:[%s4 + $0x40] sm:$0xff]
    %v500 = vld [vmem:[%s4 + $0x48] sm:$0xff]
    %v501 = vld [vmem:[%s4 + $0x50] sm:$0xff]
    %v502 = vld [vmem:[%s4 + $0x58] sm:$0xff]
    %v503 = vld [vmem:[%s4 + $0x60] sm:$0xff]
    %v504 = vld [vmem:[%s4 + $0x68] sm:$0xff]
    %v505 = vld [vmem:[%s4 + $0x70] sm:$0xff]
    %v506 = vld [vmem:[%s4 + $0x78] sm:$0xff]
    %v507 = vld [vmem:[#allocation2] sm:$0xff]
    %v508 = vld [vmem:[#allocation2 + $0x8] sm:$0xff]
    %v509 = vld [vmem:[#allocation2 + $0x10] sm:$0xff]
    %v510 = vld [vmem:[#allocation2 + $0x18] sm:$0xff]
    %v511 = vld [vmem:[#allocation2 + $0x20] sm:$0xff]
    %v512 = vld [vmem:[#allocation2 + $0x28] sm:$0xff]
    %v513 = vld [vmem:[#allocation2 + $0x30] sm:$0xff]
    %v514 = vld [vmem:[#allocation2 + $0x38] sm:$0xff]
    %v515 = vld [vmem:[#allocation2 + $0x40] sm:$0xff]
    %v516 = vld [vmem:[#allocation2 + $0x48] sm:$0xff]
    %v517 = vld [vmem:[#allocation2 + $0x50] sm:$0xff]
    %v518 = vld [vmem:[#allocation2 + $0x58] sm:$0xff]
    %v519 = vld [vmem:[#allocation2 + $0x60] sm:$0xff]
    %v520 = vld [vmem:[#allocation2 + $0x68] sm:$0xff]
    %v521 = vld [vmem:[#allocation2 + $0x70] sm:$0xff]
    %v522 = vld [vmem:[#allocation2 + $0x78] sm:$0xff]
    %523 = vmax.xlane.f32.xlu0 %v507
    %v524 = vpop.xlane.xlu0 %523
    %525 = vmax.xlane.f32.xlu0 %v508
    %v526 = vpop.xlane.xlu0 %525
    %527 = vmax.xlane.f32.xlu0 %v509
    %v528 = vpop.xlane.xlu0 %527
    %529 = vmax.xlane.f32.xlu0 %v510
    %v530 = vpop.xlane.xlu0 %529
    %531 = vmax.xlane.f32.xlu0 %v511
    %v532 = vpop.xlane.xlu0 %531
    %533 = vmax.xlane.f32.xlu0 %v512
    %v534 = vpop.xlane.xlu0 %533
    %535 = vmax.xlane.f32.xlu0 %v513
    %v536 = vpop.xlane.xlu0 %535
    %537 = vmax.xlane.f32.xlu0 %v514
    %v538 = vpop.xlane.xlu0 %537
    %539 = vmax.xlane.f32.xlu0 %v515
    %v540 = vpop.xlane.xlu0 %539
    %541 = vmax.xlane.f32.xlu0 %v516
    %v542 = vpop.xlane.xlu0 %541
    %543 = vmax.xlane.f32.xlu0 %v517
    %v544 = vpop.xlane.xlu0 %543
    %545 = vmax.xlane.f32.xlu0 %v518
    %v546 = vpop.xlane.xlu0 %545
    %547 = vmax.xlane.f32.xlu0 %v519
    %v548 = vpop.xlane.xlu0 %547
    %549 = vmax.xlane.f32.xlu0 %v520
    %v550 = vpop.xlane.xlu0 %549
    %551 = vmax.xlane.f32.xlu0 %v521
    %v552 = vpop.xlane.xlu0 %551
    %553 = vmax.xlane.f32.xlu0 %v522
    %v554 = vpop.xlane.xlu0 %553
    %v555 = vadd.f32 %v491, %v524
    %v556 = vadd.f32 %v492, %v526
    %v557 = vadd.f32 %v493, %v528
    %v558 = vadd.f32 %v494, %v530
    %v559 = vadd.f32 %v495, %v532
    %v560 = vadd.f32 %v496, %v534
    %v561 = vadd.f32 %v497, %v536
    %v562 = vadd.f32 %v498, %v538
    %v563 = vadd.f32 %v499, %v540
    %v564 = vadd.f32 %v500, %v542
    %v565 = vadd.f32 %v501, %v544
    %v566 = vadd.f32 %v502, %v546
    %v567 = vadd.f32 %v503, %v548
    %v568 = vadd.f32 %v504, %v550
    %v569 = vadd.f32 %v505, %v552
    %v570 = vadd.f32 %v506, %v554
    %v571 = vld [vmem:[#allocation3] sm:$0xff]
    %v572 = vld [vmem:[#allocation3 + $0x8] sm:$0xff]
    %v573 = vld [vmem:[#allocation3 + $0x10] sm:$0xff]
    %v574 = vld [vmem:[#allocation3 + $0x18] sm:$0xff]
    %v575 = vld [vmem:[#allocation3 + $0x20] sm:$0xff]
    %v576 = vld [vmem:[#allocation3 + $0x28] sm:$0xff]
    %v577 = vld [vmem:[#allocation3 + $0x30] sm:$0xff]
    %v578 = vld [vmem:[#allocation3 + $0x38] sm:$0xff]
    %v579 = vld [vmem:[#allocation3 + $0x40] sm:$0xff]
    %v580 = vld [vmem:[#allocation3 + $0x48] sm:$0xff]
    %v581 = vld [vmem:[#allocation3 + $0x50] sm:$0xff]
    %v582 = vld [vmem:[#allocation3 + $0x58] sm:$0xff]
    %v583 = vld [vmem:[#allocation3 + $0x60] sm:$0xff]
    %v584 = vld [vmem:[#allocation3 + $0x68] sm:$0xff]
    %v585 = vld [vmem:[#allocation3 + $0x70] sm:$0xff]
    %v586 = vld [vmem:[#allocation3 + $0x78] sm:$0xff]
    %587 = vmin.xlane.f32.xlu0 %v571
    %v588 = vpop.xlane.xlu0 %587
    %589 = vmin.xlane.f32.xlu0 %v572
    %v590 = vpop.xlane.xlu0 %589
    %591 = vmin.xlane.f32.xlu0 %v573
    %v592 = vpop.xlane.xlu0 %591
    %593 = vmin.xlane.f32.xlu0 %v574
    %v594 = vpop.xlane.xlu0 %593
    %595 = vmin.xlane.f32.xlu0 %v575
    %v596 = vpop.xlane.xlu0 %595
    %597 = vmin.xlane.f32.xlu0 %v576
    %v598 = vpop.xlane.xlu0 %597
    %599 = vmin.xlane.f32.xlu0 %v577
    %v600 = vpop.xlane.xlu0 %599
    %601 = vmin.xlane.f32.xlu0 %v578
    %v602 = vpop.xlane.xlu0 %601
    %603 = vmin.xlane.f32.xlu0 %v579
    %v604 = vpop.xlane.xlu0 %603
    %605 = vmin.xlane.f32.xlu0 %v580
    %v606 = vpop.xlane.xlu0 %605
    %607 = vmin.xlane.f32.xlu0 %v581
    %v608 = vpop.xlane.xlu0 %607
    %609 = vmin.xlane.f32.xlu0 %v582
    %v610 = vpop.xlane.xlu0 %609
    %611 = vmin.xlane.f32.xlu0 %v583
    %v612 = vpop.xlane.xlu0 %611
    %613 = vmin.xlane.f32.xlu0 %v584
    %v614 = vpop.xlane.xlu0 %613
    %615 = vmin.xlane.f32.xlu0 %v585
    %v616 = vpop.xlane.xlu0 %615
    %617 = vmin.xlane.f32.xlu0 %v586
    %v618 = vpop.xlane.xlu0 %617
    %v619 = vadd.f32 %v491, %v588
    %v620 = vadd.f32 %v492, %v590
    %v621 = vadd.f32 %v493, %v592
    %v622 = vadd.f32 %v494, %v594
    %v623 = vadd.f32 %v495, %v596
    %v624 = vadd.f32 %v496, %v598
    %v625 = vadd.f32 %v497, %v600
    %v626 = vadd.f32 %v498, %v602
    %v627 = vadd.f32 %v499, %v604
    %v628 = vadd.f32 %v500, %v606
    %v629 = vadd.f32 %v501, %v608
    %v630 = vadd.f32 %v502, %v610
    %v631 = vadd.f32 %v503, %v612
    %v632 = vadd.f32 %v504, %v614
    %v633 = vadd.f32 %v505, %v616
    %v634 = vadd.f32 %v506, %v618
    %v635 = vmax.f32 %v555, 1e-12
    %v636 = vmax.f32 %v556, 1e-12
    %v637 = vmax.f32 %v557, 1e-12
    %v638 = vmax.f32 %v558, 1e-12
    %v639 = vmax.f32 %v559, 1e-12
    %v640 = vmax.f32 %v560, 1e-12
    %v641 = vmax.f32 %v561, 1e-12
    %v642 = vmax.f32 %v562, 1e-12
    %v643 = vmax.f32 %v563, 1e-12
    %v644 = vmax.f32 %v564, 1e-12
    %v645 = vmax.f32 %v565, 1e-12
    %v646 = vmax.f32 %v566, 1e-12
    %v647 = vmax.f32 %v567, 1e-12
    %v648 = vmax.f32 %v568, 1e-12
    %v649 = vmax.f32 %v569, 1e-12
    %v650 = vmax.f32 %v570, 1e-12
    %v651 = vrsqrt.pop %v635
    %v652 = vmul.f32 %v635, %v651
    %vm653 = vcmp.eq.f32.partialorder %v635, inf
    %v654 = vsel %vm653, %v635, %v652
    %vm655 = vcmp.eq.f32.partialorder %v635, 0.0
    %v656 = vand.u32 %v635, 2147483648
    %v657 = vsel %vm655, %v656, %v654
    %v658 = vrsqrt.pop %v636
    %v659 = vmul.f32 %v636, %v658
    %vm660 = vcmp.eq.f32.partialorder %v636, inf
    %v661 = vsel %vm660, %v636, %v659
    %vm662 = vcmp.eq.f32.partialorder %v636, 0.0
    %v663 = vand.u32 %v636, 2147483648
    %v664 = vsel %vm662, %v663, %v661
    %v665 = vrsqrt.pop %v637
    %v666 = vmul.f32 %v637, %v665
    %vm667 = vcmp.eq.f32.partialorder %v637, inf
    %v668 = vsel %vm667, %v637, %v666
    %vm669 = vcmp.eq.f32.partialorder %v637, 0.0
    %v670 = vand.u32 %v637, 2147483648
    %v671 = vsel %vm669, %v670, %v668
    %v672 = vrsqrt.pop %v638
    %v673 = vmul.f32 %v638, %v672
    %vm674 = vcmp.eq.f32.partialorder %v638, inf
    %v675 = vsel %vm674, %v638, %v673
    %vm676 = vcmp.eq.f32.partialorder %v638, 0.0
    %v677 = vand.u32 %v638, 2147483648
    %v678 = vsel %vm676, %v677, %v675
    %v679 = vrsqrt.pop %v639
    %v680 = vmul.f32 %v639, %v679
    %vm681 = vcmp.eq.f32.partialorder %v639, inf
    %v682 = vsel %vm681, %v639, %v680
    %vm683 = vcmp.eq.f32.partialorder %v639, 0.0
    %v684 = vand.u32 %v639, 2147483648
    %v685 = vsel %vm683, %v684, %v682
    %v686 = vrsqrt.pop %v640
    %v687 = vmul.f32 %v640, %v686
    %vm688 = vcmp.eq.f32.partialorder %v640, inf
    %v689 = vsel %vm688, %v640, %v687
    %vm690 = vcmp.eq.f32.partialorder %v640, 0.0
    %v691 = vand.u32 %v640, 2147483648
    %v692 = vsel %vm690, %v691, %v689
    %v693 = vrsqrt.pop %v641
    %v694 = vmul.f32 %v641, %v693
    %vm695 = vcmp.eq.f32.partialorder %v641, inf
    %v696 = vsel %vm695, %v641, %v694
    %vm697 = vcmp.eq.f32.partialorder %v641, 0.0
    %v698 = vand.u32 %v641, 2147483648
    %v699 = vsel %vm697, %v698, %v696
    %v700 = vrsqrt.pop %v642
    %v701 = vmul.f32 %v642, %v700
    %vm702 = vcmp.eq.f32.partialorder %v642, inf
    %v703 = vsel %vm702, %v642, %v701
    %vm704 = vcmp.eq.f32.partialorder %v642, 0.0
    %v705 = vand.u32 %v642, 2147483648
    %v706 = vsel %vm704, %v705, %v703
    %v707 = vrsqrt.pop %v643
    %v708 = vmul.f32 %v643, %v707
    %vm709 = vcmp.eq.f32.partialorder %v643, inf
    %v710 = vsel %vm709, %v643, %v708
    %vm711 = vcmp.eq.f32.partialorder %v643, 0.0
    %v712 = vand.u32 %v643, 2147483648
    %v713 = vsel %vm711, %v712, %v710
    %v714 = vrsqrt.pop %v644
    %v715 = vmul.f32 %v644, %v714
    %vm716 = vcmp.eq.f32.partialorder %v644, inf
    %v717 = vsel %vm716, %v644, %v715
    %vm718 = vcmp.eq.f32.partialorder %v644, 0.0
    %v719 = vand.u32 %v644, 2147483648
    %v720 = vsel %vm718, %v719, %v717
    %v721 = vrsqrt.pop %v645
    %v722 = vmul.f32 %v645, %v721
    %vm723 = vcmp.eq.f32.partialorder %v645, inf
    %v724 = vsel %vm723, %v645, %v722
    %vm725 = vcmp.eq.f32.partialorder %v645, 0.0
    %v726 = vand.u32 %v645, 2147483648
    %v727 = vsel %vm725, %v726, %v724
    %v728 = vrsqrt.pop %v646
    %v729 = vmul.f32 %v646, %v728
    %vm730 = vcmp.eq.f32.partialorder %v646, inf
    %v731 = vsel %vm730, %v646, %v729
    %vm732 = vcmp.eq.f32.partialorder %v646, 0.0
    %v733 = vand.u32 %v646, 2147483648
    %v734 = vsel %vm732, %v733, %v731
    %v735 = vrsqrt.pop %v647
    %v736 = vmul.f32 %v647, %v735
    %vm737 = vcmp.eq.f32.partialorder %v647, inf
    %v738 = vsel %vm737, %v647, %v736
    %vm739 = vcmp.eq.f32.partialorder %v647, 0.0
    %v740 = vand.u32 %v647, 2147483648
    %v741 = vsel %vm739, %v740, %v738
    %v742 = vrsqrt.pop %v648
    %v743 = vmul.f32 %v648, %v742
    %vm744 = vcmp.eq.f32.partialorder %v648, inf
    %v745 = vsel %vm744, %v648, %v743
    %vm746 = vcmp.eq.f32.partialorder %v648, 0.0
    %v747 = vand.u32 %v648, 2147483648
    %v748 = vsel %vm746, %v747, %v745
    %v749 = vrsqrt.pop %v649
    %v750 = vmul.f32 %v649, %v749
    %vm751 = vcmp.eq.f32.partialorder %v649, inf
    %v752 = vsel %vm751, %v649, %v750
    %vm753 = vcmp.eq.f32.partialorder %v649, 0.0
    %v754 = vand.u32 %v649, 2147483648
    %v755 = vsel %vm753, %v754, %v752
    %v756 = vrsqrt.pop %v650
    %v757 = vmul.f32 %v650, %v756
    %vm758 = vcmp.eq.f32.partialorder %v650, inf
    %v759 = vsel %vm758, %v650, %v757
    %vm760 = vcmp.eq.f32.partialorder %v650, 0.0
    %v761 = vand.u32 %v650, 2147483648
    %v762 = vsel %vm760, %v761, %v759
    %v763 = vmax.f32 %v619, 1e-12
    %v764 = vmax.f32 %v620, 1e-12
    %v765 = vmax.f32 %v621, 1e-12
    %v766 = vmax.f32 %v622, 1e-12
    %v767 = vmax.f32 %v623, 1e-12
    %v768 = vmax.f32 %v624, 1e-12
    %v769 = vmax.f32 %v625, 1e-12
    %v770 = vmax.f32 %v626, 1e-12
    %v771 = vmax.f32 %v627, 1e-12
    %v772 = vmax.f32 %v628, 1e-12
    %v773 = vmax.f32 %v629, 1e-12
    %v774 = vmax.f32 %v630, 1e-12
    %v775 = vmax.f32 %v631, 1e-12
    %v776 = vmax.f32 %v632, 1e-12
    %v777 = vmax.f32 %v633, 1e-12
    %v778 = vmax.f32 %v634, 1e-12
    %v779 = vrsqrt.pop %v763
    %v780 = vmul.f32 %v763, %v779
    %vm781 = vcmp.eq.f32.partialorder %v763, inf
    %v782 = vsel %vm781, %v763, %v780
    %vm783 = vcmp.eq.f32.partialorder %v763, 0.0
    %v784 = vand.u32 %v763, 2147483648
    %v785 = vsel %vm783, %v784, %v782
    %v786 = vrsqrt.pop %v764
    %v787 = vmul.f32 %v764, %v786
    %vm788 = vcmp.eq.f32.partialorder %v764, inf
    %v789 = vsel %vm788, %v764, %v787
    %vm790 = vcmp.eq.f32.partialorder %v764, 0.0
    %v791 = vand.u32 %v764, 2147483648
    %v792 = vsel %vm790, %v791, %v789
    %v793 = vrsqrt.pop %v765
    %v794 = vmul.f32 %v765, %v793
    %vm795 = vcmp.eq.f32.partialorder %v765, inf
    %v796 = vsel %vm795, %v765, %v794
    %vm797 = vcmp.eq.f32.partialorder %v765, 0.0
    %v798 = vand.u32 %v765, 2147483648
    %v799 = vsel %vm797, %v798, %v796
    %v800 = vrsqrt.pop %v766
    %v801 = vmul.f32 %v766, %v800
    %vm802 = vcmp.eq.f32.partialorder %v766, inf
    %v803 = vsel %vm802, %v766, %v801
    %vm804 = vcmp.eq.f32.partialorder %v766, 0.0
    %v805 = vand.u32 %v766, 2147483648
    %v806 = vsel %vm804, %v805, %v803
    %v807 = vrsqrt.pop %v767
    %v808 = vmul.f32 %v767, %v807
    %vm809 = vcmp.eq.f32.partialorder %v767, inf
    %v810 = vsel %vm809, %v767, %v808
    %vm811 = vcmp.eq.f32.partialorder %v767, 0.0
    %v812 = vand.u32 %v767, 2147483648
    %v813 = vsel %vm811, %v812, %v810
    %v814 = vrsqrt.pop %v768
    %v815 = vmul.f32 %v768, %v814
    %vm816 = vcmp.eq.f32.partialorder %v768, inf
    %v817 = vsel %vm816, %v768, %v815
    %vm818 = vcmp.eq.f32.partialorder %v768, 0.0
    %v819 = vand.u32 %v768, 2147483648
    %v820 = vsel %vm818, %v819, %v817
    %v821 = vrsqrt.pop %v769
    %v822 = vmul.f32 %v769, %v821
    %vm823 = vcmp.eq.f32.partialorder %v769, inf
    %v824 = vsel %vm823, %v769, %v822
    %vm825 = vcmp.eq.f32.partialorder %v769, 0.0
    %v826 = vand.u32 %v769, 2147483648
    %v827 = vsel %vm825, %v826, %v824
    %v828 = vrsqrt.pop %v770
    %v829 = vmul.f32 %v770, %v828
    %vm830 = vcmp.eq.f32.partialorder %v770, inf
    %v831 = vsel %vm830, %v770, %v829
    %vm832 = vcmp.eq.f32.partialorder %v770, 0.0
    %v833 = vand.u32 %v770, 2147483648
    %v834 = vsel %vm832, %v833, %v831
    %v835 = vrsqrt.pop %v771
    %v836 = vmul.f32 %v771, %v835
    %vm837 = vcmp.eq.f32.partialorder %v771, inf
    %v838 = vsel %vm837, %v771, %v836
    %vm839 = vcmp.eq.f32.partialorder %v771, 0.0
    %v840 = vand.u32 %v771, 2147483648
    %v841 = vsel %vm839, %v840, %v838
    %v842 = vrsqrt.pop %v772
    %v843 = vmul.f32 %v772, %v842
    %vm844 = vcmp.eq.f32.partialorder %v772, inf
    %v845 = vsel %vm844, %v772, %v843
    %vm846 = vcmp.eq.f32.partialorder %v772, 0.0
    %v847 = vand.u32 %v772, 2147483648
    %v848 = vsel %vm846, %v847, %v845
    %v849 = vrsqrt.pop %v773
    %v850 = vmul.f32 %v773, %v849
    %vm851 = vcmp.eq.f32.partialorder %v773, inf
    %v852 = vsel %vm851, %v773, %v850
    %vm853 = vcmp.eq.f32.partialorder %v773, 0.0
    %v854 = vand.u32 %v773, 2147483648
    %v855 = vsel %vm853, %v854, %v852
    %v856 = vrsqrt.pop %v774
    %v857 = vmul.f32 %v774, %v856
    %vm858 = vcmp.eq.f32.partialorder %v774, inf
    %v859 = vsel %vm858, %v774, %v857
    %vm860 = vcmp.eq.f32.partialorder %v774, 0.0
    %v861 = vand.u32 %v774, 2147483648
    %v862 = vsel %vm860, %v861, %v859
    %v863 = vrsqrt.pop %v775
    %v864 = vmul.f32 %v775, %v863
    %vm865 = vcmp.eq.f32.partialorder %v775, inf
    %v866 = vsel %vm865, %v775, %v864
    %vm867 = vcmp.eq.f32.partialorder %v775, 0.0
    %v868 = vand.u32 %v775, 2147483648
    %v869 = vsel %vm867, %v868, %v866
    %v870 = vrsqrt.pop %v776
    %v871 = vmul.f32 %v776, %v870
    %vm872 = vcmp.eq.f32.partialorder %v776, inf
    %v873 = vsel %vm872, %v776, %v871
    %vm874 = vcmp.eq.f32.partialorder %v776, 0.0
    %v875 = vand.u32 %v776, 2147483648
    %v876 = vsel %vm874, %v875, %v873
    %v877 = vrsqrt.pop %v777
    %v878 = vmul.f32 %v777, %v877
    %vm879 = vcmp.eq.f32.partialorder %v777, inf
    %v880 = vsel %vm879, %v777, %v878
    %vm881 = vcmp.eq.f32.partialorder %v777, 0.0
    %v882 = vand.u32 %v777, 2147483648
    %v883 = vsel %vm881, %v882, %v880
    %v884 = vrsqrt.pop %v778
    %v885 = vmul.f32 %v778, %v884
    %vm886 = vcmp.eq.f32.partialorder %v778, inf
    %v887 = vsel %vm886, %v778, %v885
    %vm888 = vcmp.eq.f32.partialorder %v778, 0.0
    %v889 = vand.u32 %v778, 2147483648
    %v890 = vsel %vm888, %v889, %v887
    %v891 = vsub.f32 %v657, %v785
    %v892 = vsub.f32 %v664, %v792
    %v893 = vsub.f32 %v671, %v799
    %v894 = vsub.f32 %v678, %v806
    %v895 = vsub.f32 %v685, %v813
    %v896 = vsub.f32 %v692, %v820
    %v897 = vsub.f32 %v699, %v827
    %v898 = vsub.f32 %v706, %v834
    %v899 = vsub.f32 %v713, %v841
    %v900 = vsub.f32 %v720, %v848
    %v901 = vsub.f32 %v727, %v855
    %v902 = vsub.f32 %v734, %v862
    %v903 = vsub.f32 %v741, %v869
    %v904 = vsub.f32 %v748, %v876
    %v905 = vsub.f32 %v755, %v883
    %v906 = vsub.f32 %v762, %v890
    %v907 = vadd.f32 %v891, 0.3
    %v908 = vadd.f32 %v892, 0.3
    %v909 = vadd.f32 %v893, 0.3
    %v910 = vadd.f32 %v894, 0.3
    %v911 = vadd.f32 %v895, 0.3
    %v912 = vadd.f32 %v896, 0.3
    %v913 = vadd.f32 %v897, 0.3
    %v914 = vadd.f32 %v898, 0.3
    %v915 = vadd.f32 %v899, 0.3
    %v916 = vadd.f32 %v900, 0.3
    %v917 = vadd.f32 %v901, 0.3
    %v918 = vadd.f32 %v902, 0.3
    %v919 = vadd.f32 %v903, 0.3
    %v920 = vadd.f32 %v904, 0.3
    %v921 = vadd.f32 %v905, 0.3
    %v922 = vadd.f32 %v906, 0.3
    %v923 = vmax.f32 %v907, 0.0
    %v924 = vmax.f32 %v908, 0.0
    %v925 = vmax.f32 %v909, 0.0
    %v926 = vmax.f32 %v910, 0.0
    %v927 = vmax.f32 %v911, 0.0
    %v928 = vmax.f32 %v912, 0.0
    %v929 = vmax.f32 %v913, 0.0
    %v930 = vmax.f32 %v914, 0.0
    %v931 = vmax.f32 %v915, 0.0
    %v932 = vmax.f32 %v916, 0.0
    %v933 = vmax.f32 %v917, 0.0
    %v934 = vmax.f32 %v918, 0.0
    %v935 = vmax.f32 %v919, 0.0
    %v936 = vmax.f32 %v920, 0.0
    %v937 = vmax.f32 %v921, 0.0
    %v938 = vmax.f32 %v922, 0.0
    %vm939 = vcmask 7168
    %940 = vst.msk [vmem:[%s6] sm:$0xff] %vm939, %v923
    %941 = vst.msk [vmem:[%s6 + $0x8] sm:$0xff] %vm939, %v924
    %942 = vst.msk [vmem:[%s6 + $0x10] sm:$0xff] %vm939, %v925
    %943 = vst.msk [vmem:[%s6 + $0x18] sm:$0xff] %vm939, %v926
    %944 = vst.msk [vmem:[%s6 + $0x20] sm:$0xff] %vm939, %v927
    %945 = vst.msk [vmem:[%s6 + $0x28] sm:$0xff] %vm939, %v928
    %946 = vst.msk [vmem:[%s6 + $0x30] sm:$0xff] %vm939, %v929
    %947 = vst.msk [vmem:[%s6 + $0x38] sm:$0xff] %vm939, %v930
    %948 = vst.msk [vmem:[%s6 + $0x40] sm:$0xff] %vm939, %v931
    %949 = vst.msk [vmem:[%s6 + $0x48] sm:$0xff] %vm939, %v932
    %950 = vst.msk [vmem:[%s6 + $0x50] sm:$0xff] %vm939, %v933
    %951 = vst.msk [vmem:[%s6 + $0x58] sm:$0xff] %vm939, %v934
    %952 = vst.msk [vmem:[%s6 + $0x60] sm:$0xff] %vm939, %v935
    %953 = vst.msk [vmem:[%s6 + $0x68] sm:$0xff] %vm939, %v936
    %954 = vst.msk [vmem:[%s6 + $0x70] sm:$0xff] %vm939, %v937
    %955 = vst.msk [vmem:[%s6 + $0x78] sm:$0xff] %vm939, %v938
  $region33: #{tpu_custom_call.1} parent=0 // pred_fallthru
    _
  // Predicated region
  $region34: #{tpu_custom_call.1} parent=0 // pred_check
    _
  $region35: #{tpu_custom_call.1} parent=0 // pred_check_branch
    %957 = sbr.rel (0) target = $region37
  $region36: #{tpu_custom_call.1} parent=0 // pred_region
    _
  $region37: #{tpu_custom_call.1} parent=0 // pred_fallthru
    _
  // Predicated region
  $region38: #{tpu_custom_call.1} parent=0 // pred_check
    _
  $region39: #{tpu_custom_call.1} parent=0 // pred_check_branch
    %959 = sbr.rel (0) target = $region41
  $region40: #{tpu_custom_call.1} parent=0 // pred_region
    _
  $region41: #{tpu_custom_call.1} parent=0 // pred_fallthru
    _

</llo_original>
